<compile_context>
chip_gen: v7x
topology: tpu7x:2x2x1
jax: 0.10.0
libtpu: 0.0.40
codegen_flags: <defaults>
</compile_context>

<pallas_src>
import functools

import jax
import jax.numpy as jnp
from jax.experimental import pallas as pl
from jax.experimental.pallas import tpu as pltpu

IN_FEATURES = 10
HIDDEN = 32
OUT_FEATURES = 3

K_AUG = IN_FEATURES + 1   # bias row folded into the first matmul (K = 10 -> 11)
LANE = 128                # batch tile must be a multiple of the TPU lane width
TB_MAX = 32768            # max batch tile (lanes); ~12 MiB double-buffered working set
MIN_GRID_STEPS = 4        # keep >= 4 tiles when possible so v7x's 2 TCs both get work


def _round_up(n, m):
    return (n + m - 1) // m * m


def _choose_tb(batch):
    """Pick the batch tile: large (amortize per-step overhead) but >= MIN_GRID_STEPS tiles."""
    b_full = _round_up(batch, LANE)                       # smallest single-tile size
    tb = _round_up(pl.cdiv(b_full, MIN_GRID_STEPS), LANE)
    return max(LANE, min(TB_MAX, tb, b_full))


def _relu_in_bf16():
    """bf16 ReLU only where the VPU has native bf16 VALUs (v6e/v7x); f32 path elsewhere."""
    try:
        kind = jax.devices()[0].device_kind.lower()
    except Exception:
        return False
    return not any(g in kind for g in ("v2", "v3", "v4", "v5"))


def mlp_kernel(xt_ref, w1_ref, w2_ref, b2_ref, o_ref, *, relu_bf16):
    """One batch tile: out(3, TB) = W2 @ relu(W1aug @ [x; 1](11, TB)) + b2."""
    # Layer 1 (+ folded bias): bf16 operands, f32 accumulation on the MXU.
    h = jnp.dot(w1_ref[...], xt_ref[...], preferred_element_type=jnp.float32)
    # ReLU + cast for the second bf16 matmul (static, trace-time branch).
    if relu_bf16:
        hb = jnp.maximum(h.astype(jnp.bfloat16), jnp.bfloat16(0))   # native bf16 VALU
    else:
        hb = jnp.maximum(h, 0.0).astype(jnp.bfloat16)                # safe on v5e
    # Layer 2.
    out = jnp.dot(w2_ref[...], hb, preferred_element_type=jnp.float32)
    o_ref[...] = (out + b2_ref[...]).astype(o_ref.dtype)             # lane-dense (3, TB) store


@jax.jit
def lstm_trader_forward(x, w1, b1, w2, b2):
    """x: (B, 10) f32 -> (B, 3) f32.

    Weights are in PyTorch nn.Linear layout: w1 (32, 10), b1 (32,), w2 (3, 32), b2 (3,).
    """
    B = x.shape[0]
    tb = _choose_tb(B)
    grid = (pl.cdiv(B, tb),)   # ragged last block handled by Pallas (no zero-pad buffer)

    # Wrapper-side layout plumbing (single fused XLA pass over x):
    #   batch -> lane axis, cast to bf16, append the all-ones bias row.
    xt = jnp.concatenate(
        [x.T.astype(jnp.bfloat16), jnp.ones((1, B), jnp.bfloat16)], axis=0)    # (11, B)
    w1a = jnp.concatenate([w1, b1[:, None]], axis=1).astype(jnp.bfloat16)      # (32, 11)
    w2b = w2.astype(jnp.bfloat16)                                              # (3, 32)
    b2c = b2.reshape(OUT_FEATURES, 1).astype(jnp.float32)

    cost = pl.CostEstimate(
        flops=2 * B * (K_AUG * HIDDEN + HIDDEN * OUT_FEATURES),
        transcendentals=0,
        bytes_accessed=(xt.size * 2 + B * OUT_FEATURES * 4
                        + w1a.size * 2 + w2b.size * 2 + b2c.size * 4),
    )

    out_t = pl.pallas_call(
        functools.partial(mlp_kernel, relu_bf16=_relu_in_bf16()),
        out_shape=jax.ShapeDtypeStruct((OUT_FEATURES, B), jnp.float32),
        grid=grid,
        in_specs=[
            pl.BlockSpec((K_AUG, tb), lambda i: (0, i)),             # x tiles stream per step
            pl.BlockSpec((HIDDEN, K_AUG), lambda i: (0, 0)),         # weights / bias:
            pl.BlockSpec((OUT_FEATURES, HIDDEN), lambda i: (0, 0)),  #   constant block index
            pl.BlockSpec((OUT_FEATURES, 1), lambda i: (0, 0)),       #   -> VMEM-resident
        ],
        out_specs=pl.BlockSpec((OUT_FEATURES, tb), lambda i: (0, i)),
        compiler_params=pltpu.CompilerParams(
            dimension_semantics=("parallel",),     # batch tiles split across v7x's 2 TCs
            vmem_limit_bytes=32 * 1024 * 1024,     # safe on every generation incl. v7x
        ),
        cost_estimate=cost,
    )(xt, w1a, w2b, b2c)

    # Restore (B, 3) row-major layout.  Batch-last consumers should take out_t
    # directly to skip this extra HBM pass.
    return out_t.T


def init_params(key):
    """Deterministic synthetic parameters, PyTorch-Linear-like uniform init, torch layout."""
    k1, k2, k3, k4 = jax.random.split(key, 4)
    bound1 = 1.0 / jnp.sqrt(IN_FEATURES)
    bound2 = 1.0 / jnp.sqrt(HIDDEN)
    w1 = jax.random.uniform(k1, (HIDDEN, IN_FEATURES), jnp.float32, -bound1, bound1)
    b1 = jax.random.uniform(k2, (HIDDEN,), jnp.float32, -bound1, bound1)
    w2 = jax.random.uniform(k3, (OUT_FEATURES, HIDDEN), jnp.float32, -bound2, bound2)
    b2 = jax.random.uniform(k4, (OUT_FEATURES,), jnp.float32, -bound2, bound2)
    return w1, b1, w2, b2


def reference_f32(x, w1, b1, w2, b2):
    """Exact f32 PyTorch-equivalent forward."""
    h = jnp.maximum(x @ w1.T + b1, 0.0)
    return h @ w2.T + b2


def reference_bf16(x, w1, b1, w2, b2):
    """Mirrors the kernel's bf16-operand / f32-accumulation path (incl. bf16-folded b1)."""
    up = lambda a: a.astype(jnp.bfloat16).astype(jnp.float32)
    h = jnp.maximum(up(x) @ up(w1).T + up(b1), 0.0)
    return up(h) @ up(w2).T + b2


if __name__ == "__main__":
    key = jax.random.PRNGKey(0)
    k_x, k_x2, k_p = jax.random.split(key, 3)
    w1, b1, w2, b2 = init_params(k_p)

    # Small batch: single 128-lane tile overhanging the (10, 8) array (ragged read/write).
    B = 8
    x = jax.random.normal(k_x, (B, IN_FEATURES), dtype=jnp.float32)
    out = lstm_trader_forward(x, w1, b1, w2, b2)
    jax.block_until_ready(out)
    assert out.shape == (B, OUT_FEATURES)
    assert jnp.allclose(out, reference_bf16(x, w1, b1, w2, b2), atol=5e-3, rtol=5e-3)
    assert jnp.allclose(out, reference_f32(x, w1, b1, w2, b2), atol=3e-2, rtol=3e-2)

    # Non-multiple-of-128 batch: 4-step pipelined grid with a ragged last block.
    B2 = 1000
    x2 = jax.random.normal(k_x2, (B2, IN_FEATURES), dtype=jnp.float32)
    out2 = lstm_trader_forward(x2, w1, b1, w2, b2)
    jax.block_until_ready(out2)
    assert out2.shape == (B2, OUT_FEATURES)
    assert jnp.allclose(out2, reference_bf16(x2, w1, b1, w2, b2), atol=5e-3, rtol=5e-3)
    assert jnp.allclose(out2, reference_f32(x2, w1, b1, w2, b2), atol=3e-2, rtol=3e-2)

    print("KERNEL_OK")
</pallas_src>

<mosaic_0001>
module attributes {stable_mosaic.version = 11 : i64} {
  func.func @mlp_kernel(%arg0: i32, %arg1: memref<11x128xbf16, #tpu.memory_space<vmem>>, %arg2: memref<32x11xbf16, #tpu.memory_space<vmem>>, %arg3: memref<3x32xbf16, #tpu.memory_space<vmem>>, %arg4: memref<3x1xf32, #tpu.memory_space<vmem>>, %arg5: memref<3x128xf32, #tpu.memory_space<vmem>>) attributes {dimension_semantics = [#tpu.dimension_semantics<parallel>], iteration_bounds = array<i64: 1>, scalar_prefetch = 0 : i64, scratch_operands = 0 : i64, tpu.core_type = #tpu.core_type<tc>, window_params = [{transform_indices = @transform_0, window_bounds = array<i64: 11, 128>}, {pipeline_mode = #tpu.pipeline_mode<synchronous>, transform_indices = @transform_1, window_bounds = array<i64: 32, 11>}, {pipeline_mode = #tpu.pipeline_mode<synchronous>, transform_indices = @transform_2, window_bounds = array<i64: 3, 32>}, {pipeline_mode = #tpu.pipeline_mode<synchronous>, transform_indices = @transform_3, window_bounds = array<i64: 3, 1>}, {transform_indices = @transform_4, window_bounds = array<i64: 3, 128>}]} {
    %c0 = arith.constant 0 : index
    %c0_0 = arith.constant 0 : index
    %0 = vector.load %arg2[%c0, %c0_0] : memref<32x11xbf16, #tpu.memory_space<vmem>>, vector<32x11xbf16>
    %c0_1 = arith.constant 0 : index
    %c0_2 = arith.constant 0 : index
    %1 = vector.load %arg1[%c0_1, %c0_2] : memref<11x128xbf16, #tpu.memory_space<vmem>>, vector<11x128xbf16>
    %cst = arith.constant dense<0.000000e+00> : vector<32x128xf32>
    %2 = tpu.matmul %0, %1, %cst {dimension_numbers = #tpu.dot_dimension_numbers<[1], [0], [0], [1], [0, 0, 1, 1], [], []>} : vector<32x11xbf16>, vector<11x128xbf16>, vector<32x128xf32> -> vector<32x128xf32>
    %3 = arith.truncf %2 : vector<32x128xf32> to vector<32x128xbf16>
    %cst_3 = arith.constant 0.000000e+00 : bf16
    %4 = vector.broadcast %cst_3 : bf16 to vector<32x128xbf16>
    %5 = arith.maximumf %3, %4 : vector<32x128xbf16>
    %c0_4 = arith.constant 0 : index
    %c0_5 = arith.constant 0 : index
    %6 = vector.load %arg3[%c0_4, %c0_5] : memref<3x32xbf16, #tpu.memory_space<vmem>>, vector<3x32xbf16>
    %cst_6 = arith.constant dense<0.000000e+00> : vector<3x128xf32>
    %7 = tpu.matmul %6, %5, %cst_6 {dimension_numbers = #tpu.dot_dimension_numbers<[1], [0], [0], [1], [0, 0, 1, 1], [], []>} : vector<3x32xbf16>, vector<32x128xbf16>, vector<3x128xf32> -> vector<3x128xf32>
    %c0_7 = arith.constant 0 : index
    %c0_8 = arith.constant 0 : index
    %8 = vector.load %arg4[%c0_7, %c0_8] : memref<3x1xf32, #tpu.memory_space<vmem>>, vector<3x1xf32>
    %9 = vector.broadcast %8 : vector<3x1xf32> to vector<3x128xf32>
    %10 = arith.addf %7, %9 : vector<3x128xf32>
    %c0_9 = arith.constant 0 : index
    %c0_10 = arith.constant 0 : index
    %11 = vector.load %arg5[%c0_9, %c0_10] : memref<3x128xf32, #tpu.memory_space<vmem>>, vector<3x128xf32>
    tpu.vector_store %arg5[%c0_9, %c0_10], %10 {strides = array<i32>} : memref<3x128xf32, #tpu.memory_space<vmem>>, vector<3x128xf32>,
    return
  }
  func.func @transform_0(%arg0: i32) -> (i32, i32) {
    %c0_i32 = arith.constant 0 : i32
    %c0_i32_0 = arith.constant 0 : i32
    return %c0_i32, %arg0 : i32, i32
  }
  func.func @transform_1(%arg0: i32) -> (i32, i32) {
    %c0_i32 = arith.constant 0 : i32
    %c0_i32_0 = arith.constant 0 : i32
    %c0_i32_1 = arith.constant 0 : i32
    return %c0_i32, %c0_i32_0 : i32, i32
  }
  func.func @transform_2(%arg0: i32) -> (i32, i32) {
    %c0_i32 = arith.constant 0 : i32
    %c0_i32_0 = arith.constant 0 : i32
    %c0_i32_1 = arith.constant 0 : i32
    return %c0_i32, %c0_i32_0 : i32, i32
  }
  func.func @transform_3(%arg0: i32) -> (i32, i32) {
    %c0_i32 = arith.constant 0 : i32
    %c0_i32_0 = arith.constant 0 : i32
    %c0_i32_1 = arith.constant 0 : i32
    return %c0_i32, %c0_i32_0 : i32, i32
  }
  func.func @transform_4(%arg0: i32) -> (i32, i32) {
    %c0_i32 = arith.constant 0 : i32
    %c0_i32_0 = arith.constant 0 : i32
    return %c0_i32, %arg0 : i32, i32
  }
}

</mosaic_0001>

<llo_original>
// kernel: lstm_trader_forward.1
$region0: #{lstm_trader_forward.1}
  #allocation0 [shape = 'u32[]', space=smem, size = 0x4, offset = 0x4, fixed_abs, tag = 'smem constant byte address 0x4 - core index']
  #allocation1 [shape = 'u32[144,128]{1,0:T(1,128)}', space=vmem, size = 0x12000, scoped, tag = 'internal scratch']
  %s0 = inlined_call_operand.vmem [shape: bf16[11,8], index: 0, kind: input, shape index: {}]
  %s1 = inlined_call_operand.vmem [shape: bf16[32,11], index: 1, kind: input, shape index: {}]
  %s2 = inlined_call_operand.vmem [shape: bf16[3,32], index: 2, kind: input, shape index: {}]
  %s3 = inlined_call_operand.vmem [shape: f32[3,1], index: 3, kind: input, shape index: {}]
  %s4 = inlined_call_operand.hbm [shape: f32[3,8], index: 4, kind: output, shape index: {}]
  %s5 = sld [smem:[#allocation0]]
  $region26: #{lstm_trader_forward.1} parent=0
    _
  %s7 = ssub.s32 1, %s5
  %s8 = scalar_select 0, %s7, %s5
  $region1: #{lstm_trader_forward.1} parent=0
    #allocation2 [shape = 'u8[2048]{0}', space=vmem, size = 0x800, scoped, tag = 'output window, operand 0, single buffered']
    #allocation3 [shape = 's32[1]{0}', space=sflag, size = 0x4, scoped, tag = 'scoped memory for lstm_trader_forward.1']
    %9 = vsyncpa [#allocation3], 0
    // Predicated region
    $region2: #{lstm_trader_forward.1} parent=1 // pred_check
      _
    $region3: #{lstm_trader_forward.1} parent=1 // pred_check_branch
      %11 = sbr.rel (0) target = $region5
    $region4: #{lstm_trader_forward.1} parent=1 // pred_region
      _
    $region5: #{lstm_trader_forward.1} parent=1 // pred_fallthru
      _
    // Predicated region
    $region6: #{lstm_trader_forward.1} parent=1 // pred_check
      _
    $region7: #{lstm_trader_forward.1} parent=1 // pred_check_branch
      %13 = sbr.rel (0) target = $region9
    $region8: #{lstm_trader_forward.1} parent=1 // pred_region
      _
    $region9: #{lstm_trader_forward.1} parent=1 // pred_fallthru
      _
    // Predicated region
    $region10: #{lstm_trader_forward.1} parent=1 // pred_check
      _
    $region11: #{lstm_trader_forward.1} parent=1 // pred_check_branch
      %15 = sbr.rel (0) target = $region13
    $region12: #{lstm_trader_forward.1} parent=1 // pred_region
      _
    $region13: #{lstm_trader_forward.1} parent=1 // pred_fallthru
      _
    // Predicated region
    $region14: #{lstm_trader_forward.1} parent=1 // pred_check
      _
    $region15: #{lstm_trader_forward.1} parent=1 // pred_check_branch
      %17 = sbr.rel (0) target = $region17
    $region16: #{lstm_trader_forward.1} parent=1 // pred_region
      _
    $region17: #{lstm_trader_forward.1} parent=1 // pred_fallthru
      _
    %v19 = vld [vmem:[%s1] sm:$0xf]
    %v20 = vld [vmem:[%s1 + $0x4] sm:$0xf]
    %v21 = vld [vmem:[%s1 + $0x8] sm:$0xf]
    %v22 = vld [vmem:[%s1 + $0xc] sm:$0xf]
    %v23 = vld [vmem:[%s0] sm:$0xf]
    %v24 = vld [vmem:[%s0 + $0x4] sm:$0x3]
    %v29 = vunpack.c.l.b16 %v19
    %v30 = vunpack.c.l.b16 %v20
    %v31 = vunpack.c.l.b16 %v21
    %v32 = vunpack.c.l.b16 %v22
    %v33 = vpack.c.b16 %v30, %v29
    %v34 = vpack.c.b16 %v32, %v31
    %v37 = vunpack.c.l.b16 %v23
    %v38 = vunpack.c.l.b16 %v24
    %v39 = vpack.c.b16 %v38, %v37
    %vm40 = vcmask 89088
    %v42 = vsel %vm40, %v33, 0
    %v45 = vsel %vm40, %v34, 0
    %vm47 = vcmask 1044480
    %vm48 = vcmask 1045504
    %v49 = vsel %vm47, 4294967295, 65535
    %v50 = vsel %vm48, %v49, 0
    %v52 = vand.u32 %v39, %v50
    %54 = vmatprep.subr.bf16.mxu0 0
    %55 = vmatpush1.bf16.msra.mxu0 %v52
    %56 = vmatprep.subr.bf16.mxu0 0
    %57 = vmatpush1.bf16.msra.mxu0 0
    %58 = vmatprep.subr.bf16.mxu0 0
    %59 = vmatpush1.bf16.msra.mxu0 0
    %60 = vmatprep.subr.bf16.mxu0 0
    %61 = vmatpush1.bf16.msra.mxu0 0
    %62 = vmatprep.subr.bf16.mxu0 0
    %63 = vmatpush1.bf16.msra.mxu0 0
    %64 = vmatprep.subr.bf16.mxu0 0
    %65 = vmatpush1.bf16.msra.mxu0 0
    %66 = vmatprep.subr.bf16.mxu0 0
    %67 = vmatpush1.bf16.msra.mxu0 0
    %68 = vmatprep.subr.bf16.mxu0 0
    %69 = vmatpush1.bf16.msra.mxu0 0
    %70 = vmatprep.subr.bf16.mxu0 0
    %71 = vmatpush1.bf16.msra.mxu0 0
    %72 = vmatprep.subr.bf16.mxu0 0
    %73 = vmatpush1.bf16.msra.mxu0 0
    %74 = vmatprep.subr.bf16.mxu0 0
    %75 = vmatpush1.bf16.msra.mxu0 0
    %76 = vmatprep.subr.bf16.mxu0 0
    %77 = vmatpush1.bf16.msra.mxu0 0
    %78 = vmatprep.subr.bf16.mxu0 0
    %79 = vmatpush1.bf16.msra.mxu0 0
    %80 = vmatprep.subr.bf16.mxu0 0
    %81 = vmatpush1.bf16.msra.mxu0 0
    %82 = vmatprep.subr.bf16.mxu0 0
    %83 = vmatpush1.bf16.msra.mxu0 0
    %84 = vmatprep.subr.bf16.mxu0 0
    %85 = vmatpush1.bf16.msra.mxu0 0
    %86 = vmatprep.mubr.bf16.mxu0 0
    %87 = vmatmul.mubr.bf16.gmra.mrb[0].mxu0 %v42
    %v88 = vpop.f32.mrb[0].mxu0
    %v89 = vadd.f32 0.0, %v88
    %v90 = vpop.f32.mrb[0].mxu0
    %v91 = vpop.f32.mrb[0].mxu0
    %v92 = vadd.f32 0.0, %v91
    %v93 = vpop.f32.mrb[0].mxu0
    %94 = vmatprep.mubr.bf16.mxu0 0
    %95 = vmatmul.mubr.bf16.gmra.mrb[0].mxu0 %v45
    %v96 = vpop.f32.mrb[0].mxu0
    %v97 = vadd.f32 0.0, %v96
    %v98 = vpop.f32.mrb[0].mxu0
    %v99 = vpop.f32.mrb[0].mxu0
    %v100 = vadd.f32 0.0, %v99
    %v101 = vpop.f32.mrb[0].mxu0
    %102 = vdwg.mxu0
    %v103 = vpack.c.bf16 %v92, %v89
    %v104 = vpack.c.bf16 %v100, %v97
    %v105 = vmax.bf16 %v103, 0
    %v106 = vmax.bf16 %v104, 0
    %v107 = vld [vmem:[%s2] sm:$0x3]
    %v108 = vld [vmem:[%s3] sm:$0x7]
    %110 = vset.pattern.permute.xlu0 0
    %111 = vperm.xlu0 %110, %v108
    %v112 = vpop.permute.xlu0 %111
    %vm114 = vcmask 261120
    %v116 = vsel %vm114, %v107, 0
    %118 = vmatprep.subr.bf16.mxu0 0
    %119 = vmatpush1.bf16.msra.mxu0 %v105
    %120 = vmatprep.subr.bf16.mxu0 0
    %121 = vmatpush1.bf16.msra.mxu0 %v106
    %122 = vmatprep.subr.bf16.mxu0 0
    %123 = vmatpush1.bf16.msra.mxu0 0
    %124 = vmatprep.subr.bf16.mxu0 0
    %125 = vmatpush1.bf16.msra.mxu0 0
    %126 = vmatprep.subr.bf16.mxu0 0
    %127 = vmatpush1.bf16.msra.mxu0 0
    %128 = vmatprep.subr.bf16.mxu0 0
    %129 = vmatpush1.bf16.msra.mxu0 0
    %130 = vmatprep.subr.bf16.mxu0 0
    %131 = vmatpush1.bf16.msra.mxu0 0
    %132 = vmatprep.subr.bf16.mxu0 0
    %133 = vmatpush1.bf16.msra.mxu0 0
    %134 = vmatprep.subr.bf16.mxu0 0
    %135 = vmatpush1.bf16.msra.mxu0 0
    %136 = vmatprep.subr.bf16.mxu0 0
    %137 = vmatpush1.bf16.msra.mxu0 0
    %138 = vmatprep.subr.bf16.mxu0 0
    %139 = vmatpush1.bf16.msra.mxu0 0
    %140 = vmatprep.subr.bf16.mxu0 0
    %141 = vmatpush1.bf16.msra.mxu0 0
    %142 = vmatprep.subr.bf16.mxu0 0
    %143 = vmatpush1.bf16.msra.mxu0 0
    %144 = vmatprep.subr.bf16.mxu0 0
    %145 = vmatpush1.bf16.msra.mxu0 0
    %146 = vmatprep.subr.bf16.mxu0 0
    %147 = vmatpush1.bf16.msra.mxu0 0
    %148 = vmatprep.subr.bf16.mxu0 0
    %149 = vmatpush1.bf16.msra.mxu0 0
    %150 = vmatprep.mubr.bf16.mxu0 0
    %151 = vmatmul.mubr.bf16.gmra.mrb[0].mxu0 %v116
    %v152 = vpop.f32.mrb[0].mxu0
    %v153 = vadd.f32 %v112, %v152
    %v154 = vpop.f32.mrb[0].mxu0
    %v155 = vpop.f32.mrb[0].mxu0
    %v156 = vpop.f32.mrb[0].mxu0
    %157 = vdwg.mxu0
    %158 = vst [vmem:[#allocation2] sm:$0x7] %v153
    // Predicated region
    $region18: #{lstm_trader_forward.1} parent=1 // pred_check
      _
    $region19: #{lstm_trader_forward.1} parent=1 // pred_check_branch
      %160 = sbr.rel (0) target = $region21
    $region20: #{lstm_trader_forward.1} parent=1 // pred_region
      %s162 = ssub.s32 64, 64
      %163 = vsyncadd [#allocation3], %s162
      %s165 = sshll.u32 [#allocation2], 4
      %s166 = int_to_ptr.vmem [resolvable:$true] %s165
      %168 = dma.vmem_to_hbm [thread:$0]  %s166, 64, %s4, [#allocation3]
    $region21: #{lstm_trader_forward.1} parent=1 // pred_fallthru
      _
    // Predicated region
    $region22: #{lstm_trader_forward.1} parent=1 // pred_check
      _
    $region23: #{lstm_trader_forward.1} parent=1 // pred_check_branch
      %170 = sbr.rel (0) target = $region25
    $region24: #{lstm_trader_forward.1} parent=1 // pred_region
      %171 = dma.done [#allocation3], 64
    $region25: #{lstm_trader_forward.1} parent=1 // pred_fallthru
      _
    %172 = vsyncpa [#allocation3], 1

</llo_original>
